<compile_context>
chip_gen: v6e
topology: v6e:2x2x1
jax: 0.10.0
libtpu: 0.0.40
codegen_flags: <defaults>
</compile_context>

<pallas_src>
import functools

import jax
import jax.numpy as jnp
from jax.experimental import pallas as pl
from jax.experimental.pallas import tpu as pltpu

LANE = 128      # last-dim (lane) alignment for padded weight N dims
SUBLANE = 16    # bf16 sublane packing / batch-tile granularity


def _round_up(x, m):
    return ((x + m - 1) // m) * m


def _cdiv(a, b):
    return -(-a // b)


# ---------------------------------------------------------------------------
# Kernel
# ---------------------------------------------------------------------------
def _mlp_kernel(*refs, num_hidden_layers, activation, approx_sigmoid):
    # refs = (x_ref, w_0, ..., w_L (output layer), bias_pack_ref, out_ref)
    x_ref = refs[0]
    w_refs = refs[1:2 + num_hidden_layers]          # L+1 weight refs
    bias_ref = refs[2 + num_hidden_layers]          # (L+1, BN_W) f32
    out_ref = refs[-1]                              # (TB, output_dim) f32

    def bias_row(layer, width):
        row = bias_ref[layer]                       # (BN_W,) f32
        return row if row.shape[0] == width else row[:width]  # width % 128 == 0

    x = x_ref[...].astype(jnp.bfloat16)             # (TB, D0s) cast in-kernel

    for layer in range(num_hidden_layers):
        w = w_refs[layer][...]                      # bf16 (Kp, Hp)
        h = jnp.dot(x, w, preferred_element_type=jnp.float32)
        h = h + bias_row(layer, w.shape[1])
        if activation == "relu":
            h = jnp.maximum(h, 0.0)
        else:                                       # "tanh" (validated host-side)
            h = jnp.tanh(h)
        # BatchNorm (eval) folded into the next layer's weight/bias; Dropout = identity.
        x = h.astype(jnp.bfloat16)

    w_out = w_refs[num_hidden_layers][...]          # bf16 (Hp, OUTp)
    z = jnp.dot(x, w_out, preferred_element_type=jnp.float32)
    z = z + bias_row(num_hidden_layers, w_out.shape[1])

    if approx_sigmoid:
        # exp on EUP, approx reciprocal also on EUP (keeps VALU slots free).
        sig = pl.reciprocal(1.0 + jnp.exp(-z), approx=True)
    else:
        sig = 1.0 / (1.0 + jnp.exp(-z))

    # Store only the real output columns (out array is unpadded in its last dim).
    out_ref[...] = sig[:, :out_ref.shape[1]].astype(out_ref.dtype)


# ---------------------------------------------------------------------------
# Host-side parameter prep: BN fold (f32) + padding + bf16 cast
# ---------------------------------------------------------------------------
def _prepare_linears(params, num_hidden_layers):
    """params: [w, b, scale, shift]*L + [w_out, b_out]  (BN expressed as eval-mode
    per-feature scale/shift).  Folds scale/shift of layer l into layer l+1:
        (x*s + t) @ W + b == x @ (diag(s) @ W) + (t @ W + b)
    Returns list of (w_f32[K,N], b_f32[N]) with BN fully absorbed."""
    linears = []
    idx = 0
    prev_scale = None
    prev_shift = None
    for _ in range(num_hidden_layers):
        w, b, scale, shift = params[idx:idx + 4]
        idx += 4
        w = jnp.asarray(w, jnp.float32)
        b = jnp.reshape(jnp.asarray(b, jnp.float32), (-1,))
        scale = jnp.reshape(jnp.asarray(scale, jnp.float32), (-1,))
        shift = jnp.reshape(jnp.asarray(shift, jnp.float32), (-1,))
        if prev_scale is not None:
            # NOTE: fold is done in f32; bf16 cast happens after padding.
            b = b + prev_shift @ w
            w = prev_scale[:, None] * w
        linears.append((w, b))
        prev_scale, prev_shift = scale, shift
    w_out = jnp.asarray(params[idx], jnp.float32)
    b_out = jnp.reshape(jnp.asarray(params[idx + 1], jnp.float32), (-1,))
    if prev_scale is not None:
        b_out = b_out + prev_shift @ w_out
        w_out = prev_scale[:, None] * w_out
    linears.append((w_out, b_out))
    return linears


def _pad_linears(linears, input_dim):
    """Pads each Linear: K to the previous (padded) activation width, N to a multiple
    of 128 lanes.  The input feature dim is only rounded to the sublane (8) so x needs
    no 128-lane host-side padding pass."""
    d0s = _round_up(input_dim, 8)
    padded = []
    prev_w = d0s
    for (w, b) in linears:
        K, N = w.shape
        Kp, Np = prev_w, _round_up(N, LANE)
        wp = jnp.zeros((Kp, Np), jnp.float32).at[:K, :N].set(w).astype(jnp.bfloat16)
        bp = jnp.zeros((Np,), jnp.float32).at[:N].set(b)
        padded.append((wp, bp))
        prev_w = Np
    return padded, d0s


# ---------------------------------------------------------------------------
# Wrapper
# ---------------------------------------------------------------------------
def mlp_forward(x, params, *, num_hidden_layers, activation="relu",
                batch_tile=512, approx_sigmoid=True):
    """x: [B, input_dim] float32. params: flat list from init_params.
    Returns [B, output_dim] float32 (sigmoid outputs, eval-mode semantics)."""
    if activation not in ("relu", "tanh"):
        raise ValueError(f"Unsupported activation: {activation}")

    B, input_dim = x.shape
    linears = _prepare_linears(params, num_hidden_layers)
    output_dim = linears[-1][0].shape[1]

    padded, D0s = _pad_linears(linears, input_dim)
    weights = [wp for (wp, _) in padded]

    # Pack all biases into one padded f32 [L+1, BN_W] operand (single DMA).
    bn_w = max(bp.shape[0] for (_, bp) in padded)
    bias_pack = jnp.zeros((len(padded), bn_w), jnp.float32)
    for i, (_, bp) in enumerate(padded):
        bias_pack = bias_pack.at[i, :bp.shape[0]].set(bp)

    # ---- Generation-aware VMEM budget --------------------------------------
    try:
        vmem_cap = int(pltpu.get_tpu_info().vmem_capacity_bytes)
    except Exception:                       # pragma: no cover - conservative fallback
        vmem_cap = 128 * 2**20
    budget_cap = int(vmem_cap * 0.78)       # ~100 MiB on v5e/v6e, ~50 MiB on v7x

    weight_bytes = sum(w.size * 2 for w in weights)   # bf16, single-buffered
    bias_bytes = bias_pack.size * 4                   # f32,  single-buffered
    max_np = max(w.shape[1] for w in weights)

    def vmem_needed(tb):
        x_tile = tb * _round_up(D0s, LANE) * 4        # f32, VMEM lanes pad to 128
        o_tile = tb * _round_up(output_dim, LANE) * 4
        act = tb * max_np * 6 * 2                     # f32 + bf16 intermediates, 2x slack
        return weight_bytes + bias_bytes + 2 * (x_tile + o_tile) + act

    # ---- Batch tile: >=2 grid steps when possible (v7x megacore), large otherwise ---
    if B <= batch_tile:
        if B > 2 * SUBLANE:
            TB = _round_up(_cdiv(B, 2), SUBLANE)      # >=2 steps for 2-TC sharding
        else:
            TB = _round_up(max(B, 1), SUBLANE)
    else:
        TB = _round_up(batch_tile, SUBLANE)
    while vmem_needed(TB) > budget_cap and TB > 64:
        TB = _round_up(max(TB // 2, 64), SUBLANE)
    assert vmem_needed(TB) <= budget_cap, (
        "resident-weight design exceeds this chip's VMEM budget")
    # TODO(synk): for weight sets beyond the VMEM budget, stack hidden weights [L, Hp, Hp]
    # and stream one layer per 'arbitrary' grid step (pltpu.emit_pipeline) instead.

    B_pad = _round_up(B, TB)
    grid = (B_pad // TB,)

    # ---- Input: f32, no host-side bf16/lane-padding pass (cast inside the kernel) ----
    x_in = x.astype(jnp.float32)
    if B_pad != B or D0s != input_dim:
        x_in = jnp.pad(x_in, ((0, B_pad - B), (0, D0s - input_dim)))

    resident = dict(pipeline_mode=pl.Buffered(1))     # constant block index -> 1 buffer
    in_specs = [pl.BlockSpec((TB, D0s), lambda i: (i, 0))]
    in_specs += [pl.BlockSpec(w.shape, lambda i: (0, 0), **resident) for w in weights]
    in_specs += [pl.BlockSpec(bias_pack.shape, lambda i: (0, 0), **resident)]
    # Output unpadded in the last dim (full-dim block is exempt from the 128 rule).
    out_spec = pl.BlockSpec((TB, output_dim), lambda i: (i, 0))

    vmem_limit = int(min(budget_cap, max(32 * 2**20, vmem_needed(TB) + 4 * 2**20)))

    # ---- Cost estimate -------------------------------------------------------
    flops = 2 * B_pad * sum(w.shape[0] * w.shape[1] for w in weights)
    transcendentals = B_pad * _round_up(output_dim, LANE)      # exp in sigmoid
    if activation == "tanh":
        transcendentals += B_pad * sum(w.shape[1] for w in weights[:-1])
    bytes_accessed = (x_in.size * 4 + weight_bytes + bias_bytes
                      + B_pad * output_dim * 4)
    cost = pl.CostEstimate(flops=flops, transcendentals=transcendentals,
                           bytes_accessed=bytes_accessed)

    kernel = functools.partial(
        _mlp_kernel, num_hidden_layers=num_hidden_layers, activation=activation,
        approx_sigmoid=approx_sigmoid)

    out = pl.pallas_call(
        kernel,
        out_shape=jax.ShapeDtypeStruct((B_pad, output_dim), jnp.float32),
        grid=grid,
        in_specs=in_specs,
        out_specs=out_spec,
        compiler_params=pltpu.CompilerParams(
            dimension_semantics=("parallel",),
            vmem_limit_bytes=vmem_limit,
        ),
        cost_estimate=cost,
    )(x_in, *weights, bias_pack)

    return out[:B] if B_pad != B else out


# ---------------------------------------------------------------------------
# Init (mirrors the PyTorch module) and a pure-JAX reference
# ---------------------------------------------------------------------------
def init_params(key, input_dim, num_hidden_layers, hidden_dim, output_dim,
                activation="relu"):
    """kaiming_normal_(fan_in) Linear weights, zero biases, BatchNorm1d defaults
    (gamma=1, beta=0, running_mean=0, running_var=1, eps=1e-5) expressed as
    eval-mode per-feature scale/shift.  Weights stored [in, out]."""
    gain = jnp.sqrt(2.0) if activation == "relu" else 5.0 / 3.0
    eps = 1e-5
    params = []
    current_dim = input_dim
    for _ in range(num_hidden_layers):
        key, wk = jax.random.split(key)
        std = gain / jnp.sqrt(jnp.float32(current_dim))
        w = jax.random.normal(wk, (current_dim, hidden_dim), jnp.float32) * std
        b = jnp.zeros((hidden_dim,), jnp.float32)
        scale = jnp.full((hidden_dim,), 1.0 / jnp.sqrt(1.0 + eps), jnp.float32)
        shift = jnp.zeros((hidden_dim,), jnp.float32)
        params += [w, b, scale, shift]
        current_dim = hidden_dim
    key, wk = jax.random.split(key)
    std = gain / jnp.sqrt(jnp.float32(current_dim))
    w_out = jax.random.normal(wk, (current_dim, output_dim), jnp.float32) * std
    b_out = jnp.zeros((output_dim,), jnp.float32)
    params += [w_out, b_out]
    return params


def mlp_reference(x, params, *, num_hidden_layers, activation="relu"):
    h = x.astype(jnp.float32)
    idx = 0
    for _ in range(num_hidden_layers):
        w, b, scale, shift = params[idx:idx + 4]
        idx += 4
        h = h @ w + jnp.reshape(b, (1, -1))
        h = jnp.maximum(h, 0.0) if activation == "relu" else jnp.tanh(h)
        h = h * jnp.reshape(scale, (1, -1)) + jnp.reshape(shift, (1, -1))
    w, b = params[idx], params[idx + 1]
    return jax.nn.sigmoid(h @ w + jnp.reshape(b, (1, -1)))


if __name__ == "__main__":
    # Small synthetic config consistent with the module's constructor.
    batch = 8
    input_dim = 16
    num_hidden_layers = 2
    hidden_dim = 32
    output_dim = 4
    activation = "relu"

    key = jax.random.PRNGKey(0)
    key, xk = jax.random.split(key)
    x = jax.random.normal(xk, (batch, input_dim), jnp.float32)
    params = init_params(key, input_dim, num_hidden_layers, hidden_dim,
                         output_dim, activation)

    out = mlp_forward(x, params, num_hidden_layers=num_hidden_layers,
                      activation=activation)
    out = jax.block_until_ready(out)

    ref = mlp_reference(x, params, num_hidden_layers=num_hidden_layers,
                        activation=activation)
    assert out.shape == (batch, output_dim)
    # bf16 matmul inputs + approx reciprocal => compare with a relaxed tolerance.
    assert jnp.allclose(out, ref, atol=2e-2, rtol=2e-2), "mismatch vs reference"

    # TODO(synk): training-mode BatchNorm (batch statistics), Dropout RNG masking and
    # the extract_hidden_activations path are not implemented; kernel reproduces
    # eval-mode forward semantics only.
    print("KERNEL_OK")
</pallas_src>

<mosaic_0001>
module attributes {stable_mosaic.version = 11 : i64} {
  func.func @_mlp_kernel(%arg0: i32, %arg1: memref<16x16xf32, #tpu.memory_space<vmem>>, %arg2: memref<16x128xbf16, #tpu.memory_space<vmem>>, %arg3: memref<128x128xbf16, #tpu.memory_space<vmem>>, %arg4: memref<128x128xbf16, #tpu.memory_space<vmem>>, %arg5: memref<3x128xf32, #tpu.memory_space<vmem>>, %arg6: memref<16x4xf32, #tpu.memory_space<vmem>>) attributes {dimension_semantics = [#tpu.dimension_semantics<parallel>], iteration_bounds = array<i64: 1>, scalar_prefetch = 0 : i64, scratch_operands = 0 : i64, tpu.core_type = #tpu.core_type<tc>, window_params = [{transform_indices = @transform_0, window_bounds = array<i64: 16, 16>}, {pipeline_mode = #tpu.pipeline_mode<synchronous>, transform_indices = @transform_1, window_bounds = array<i64: 16, 128>}, {pipeline_mode = #tpu.pipeline_mode<synchronous>, transform_indices = @transform_2, window_bounds = array<i64: 128, 128>}, {pipeline_mode = #tpu.pipeline_mode<synchronous>, transform_indices = @transform_3, window_bounds = array<i64: 128, 128>}, {pipeline_mode = #tpu.pipeline_mode<synchronous>, transform_indices = @transform_4, window_bounds = array<i64: 3, 128>}, {transform_indices = @transform_5, window_bounds = array<i64: 16, 4>}]} {
    %c0 = arith.constant 0 : index
    %c0_0 = arith.constant 0 : index
    %0 = vector.load %arg1[%c0, %c0_0] : memref<16x16xf32, #tpu.memory_space<vmem>>, vector<16x16xf32>
    %1 = arith.truncf %0 : vector<16x16xf32> to vector<16x16xbf16>
    %c0_1 = arith.constant 0 : index
    %c0_2 = arith.constant 0 : index
    %2 = vector.load %arg2[%c0_1, %c0_2] : memref<16x128xbf16, #tpu.memory_space<vmem>>, vector<16x128xbf16>
    %cst = arith.constant dense<0.000000e+00> : vector<16x128xf32>
    %3 = tpu.matmul %1, %2, %cst {dimension_numbers = #tpu.dot_dimension_numbers<[1], [0], [0], [1], [0, 0, 1, 1], [], []>} : vector<16x16xbf16>, vector<16x128xbf16>, vector<16x128xf32> -> vector<16x128xf32>
    %c0_3 = arith.constant 0 : index
    %c0_4 = arith.constant 0 : index
    %4 = vector.load %arg5[%c0_3, %c0_4] : memref<3x128xf32, #tpu.memory_space<vmem>>, vector<1x128xf32>
    %5 = vector.shape_cast %4 : vector<1x128xf32> to vector<128xf32>
    %6 = vector.shape_cast %5 : vector<128xf32> to vector<1x128xf32>
    %7 = vector.broadcast %6 : vector<1x128xf32> to vector<16x128xf32>
    %8 = arith.addf %3, %7 : vector<16x128xf32>
    %cst_5 = arith.constant 0.000000e+00 : f32
    %9 = vector.broadcast %cst_5 : f32 to vector<16x128xf32>
    %10 = arith.maximumf %8, %9 : vector<16x128xf32>
    %11 = arith.truncf %10 : vector<16x128xf32> to vector<16x128xbf16>
    %c0_6 = arith.constant 0 : index
    %c0_7 = arith.constant 0 : index
    %12 = vector.load %arg3[%c0_6, %c0_7] : memref<128x128xbf16, #tpu.memory_space<vmem>>, vector<128x128xbf16>
    %cst_8 = arith.constant dense<0.000000e+00> : vector<16x128xf32>
    %13 = tpu.matmul %11, %12, %cst_8 {dimension_numbers = #tpu.dot_dimension_numbers<[1], [0], [0], [1], [0, 0, 1, 1], [], []>} : vector<16x128xbf16>, vector<128x128xbf16>, vector<16x128xf32> -> vector<16x128xf32>
    %c1 = arith.constant 1 : index
    %c0_9 = arith.constant 0 : index
    %14 = vector.load %arg5[%c1, %c0_9] : memref<3x128xf32, #tpu.memory_space<vmem>>, vector<1x128xf32>
    %15 = vector.shape_cast %14 : vector<1x128xf32> to vector<128xf32>
    %16 = vector.shape_cast %15 : vector<128xf32> to vector<1x128xf32>
    %17 = vector.broadcast %16 : vector<1x128xf32> to vector<16x128xf32>
    %18 = arith.addf %13, %17 : vector<16x128xf32>
    %cst_10 = arith.constant 0.000000e+00 : f32
    %19 = vector.broadcast %cst_10 : f32 to vector<16x128xf32>
    %20 = arith.maximumf %18, %19 : vector<16x128xf32>
    %21 = arith.truncf %20 : vector<16x128xf32> to vector<16x128xbf16>
    %c0_11 = arith.constant 0 : index
    %c0_12 = arith.constant 0 : index
    %22 = vector.load %arg4[%c0_11, %c0_12] : memref<128x128xbf16, #tpu.memory_space<vmem>>, vector<128x128xbf16>
    %cst_13 = arith.constant dense<0.000000e+00> : vector<16x128xf32>
    %23 = tpu.matmul %21, %22, %cst_13 {dimension_numbers = #tpu.dot_dimension_numbers<[1], [0], [0], [1], [0, 0, 1, 1], [], []>} : vector<16x128xbf16>, vector<128x128xbf16>, vector<16x128xf32> -> vector<16x128xf32>
    %c2 = arith.constant 2 : index
    %c0_14 = arith.constant 0 : index
    %24 = vector.load %arg5[%c2, %c0_14] : memref<3x128xf32, #tpu.memory_space<vmem>>, vector<1x128xf32>
    %25 = vector.shape_cast %24 : vector<1x128xf32> to vector<128xf32>
    %26 = vector.shape_cast %25 : vector<128xf32> to vector<1x128xf32>
    %27 = vector.broadcast %26 : vector<1x128xf32> to vector<16x128xf32>
    %28 = arith.addf %23, %27 : vector<16x128xf32>
    %cst_15 = arith.constant 0.000000e+00 : f32
    %29 = vector.broadcast %cst_15 : f32 to vector<16x128xf32>
    %30 = arith.subf %29, %28 : vector<16x128xf32>
    %31 = math.exp %30 : vector<16x128xf32>
    %cst_16 = arith.constant 1.000000e+00 : f32
    %32 = vector.broadcast %cst_16 : f32 to vector<16x128xf32>
    %33 = arith.addf %32, %31 : vector<16x128xf32>
    %34 = tpu.reciprocal %33 {approx = true} : vector<16x128xf32> -> vector<16x128xf32>
    %35 = vector.extract_strided_slice %34 {offsets = [0, 0], sizes = [16, 4], strides = [1, 1]} : vector<16x128xf32> to vector<16x4xf32>
    %c0_17 = arith.constant 0 : index
    %c0_18 = arith.constant 0 : index
    %36 = vector.load %arg6[%c0_17, %c0_18] : memref<16x4xf32, #tpu.memory_space<vmem>>, vector<16x4xf32>
    tpu.vector_store %arg6[%c0_17, %c0_18], %35 {strides = array<i32>} : memref<16x4xf32, #tpu.memory_space<vmem>>, vector<16x4xf32>,
    return
  }
  func.func @transform_0(%arg0: i32) -> (i32, i32) {
    %c0_i32 = arith.constant 0 : i32
    %c0_i32_0 = arith.constant 0 : i32
    return %arg0, %c0_i32 : i32, i32
  }
  func.func @transform_1(%arg0: i32) -> (i32, i32) {
    %c0_i32 = arith.constant 0 : i32
    %c0_i32_0 = arith.constant 0 : i32
    %c0_i32_1 = arith.constant 0 : i32
    return %c0_i32, %c0_i32_0 : i32, i32
  }
  func.func @transform_2(%arg0: i32) -> (i32, i32) {
    %c0_i32 = arith.constant 0 : i32
    %c0_i32_0 = arith.constant 0 : i32
    %c0_i32_1 = arith.constant 0 : i32
    return %c0_i32, %c0_i32_0 : i32, i32
  }
  func.func @transform_3(%arg0: i32) -> (i32, i32) {
    %c0_i32 = arith.constant 0 : i32
    %c0_i32_0 = arith.constant 0 : i32
    %c0_i32_1 = arith.constant 0 : i32
    return %c0_i32, %c0_i32_0 : i32, i32
  }
  func.func @transform_4(%arg0: i32) -> (i32, i32) {
    %c0_i32 = arith.constant 0 : i32
    %c0_i32_0 = arith.constant 0 : i32
    %c0_i32_1 = arith.constant 0 : i32
    return %c0_i32, %c0_i32_0 : i32, i32
  }
  func.func @transform_5(%arg0: i32) -> (i32, i32) {
    %c0_i32 = arith.constant 0 : i32
    %c0_i32_0 = arith.constant 0 : i32
    return %arg0, %c0_i32 : i32, i32
  }
}

</mosaic_0001>

<llo_original>
// kernel: tpu_custom_call.1
$region0: #{tpu_custom_call.1}
  #allocation0 [shape = 'u32[]', space=smem, size = 0x4, offset = 0x4, fixed_abs, tag = 'smem constant byte address 0x4 - core index']
  #allocation1 [shape = 'u32[144,128]{1,0:T(1,128)}', space=vmem, size = 0x12000, scoped, tag = 'internal scratch']
  %s0 = inlined_call_operand.hbm [shape: f32[16,16], index: 0, kind: input, shape index: {}]
  %s1 = inlined_call_operand.hbm [shape: bf16[16,128], index: 1, kind: input, shape index: {}]
  %s2 = inlined_call_operand.hbm [shape: bf16[128,128], index: 2, kind: input, shape index: {}]
  %s3 = inlined_call_operand.hbm [shape: bf16[128,128], index: 3, kind: input, shape index: {}]
  %s4 = inlined_call_operand.vmem [shape: f32[3,128], index: 4, kind: input, shape index: {}]
  %s5 = inlined_call_operand.vmem [shape: f32[16,4], index: 5, kind: output, shape index: {}]
  %s6 = sld [smem:[#allocation0]]
  $region46: #{tpu_custom_call.1} parent=0
    _
  %s8 = ssub.s32 1, %s6
  %s9 = scalar_select 0, %s8, %s6
  $region1: #{tpu_custom_call.1} parent=0
    #allocation2 [shape = 'u8[8192]{0}', space=vmem, size = 0x2000, scoped, tag = 'input window, operand 0, single buffered']
    #allocation3 [shape = 's32[1]{0}', space=sflag, size = 0x4, scoped, tag = 'scoped memory for tpu_custom_call.1']
    #allocation4 [shape = 'u8[4096]{0}', space=vmem, size = 0x1000, scoped, tag = 'input window, operand 1, single buffered']
    #allocation5 [shape = 's32[1]{0}', space=sflag, size = 0x4, scoped, tag = 'scoped memory for tpu_custom_call.1']
    #allocation6 [shape = 'u8[32768]{0}', space=vmem, size = 0x8000, scoped, tag = 'input window, operand 2, single buffered']
    #allocation7 [shape = 'u8[32768]{0}', space=vmem, size = 0x8000, scoped, tag = 'input window, operand 3, single buffered']
    #allocation8 [shape = 's32[1]{0}', space=sflag, size = 0x4, scoped, tag = 'scoped memory for tpu_custom_call.1']
    %10 = vsyncpa [#allocation3], 0
    %11 = vsyncpa [#allocation5], 0
    %12 = vsyncpa [#allocation8], 0
    // Predicated region
    $region2: #{tpu_custom_call.1} parent=1 // pred_check
      _
    $region3: #{tpu_custom_call.1} parent=1 // pred_check_branch
      %14 = sbr.rel (0) target = $region5
    $region4: #{tpu_custom_call.1} parent=1 // pred_region
      %s16 = ssub.s32 256, 256
      %17 = vsyncadd [#allocation3], %s16
      %s18 = sshll.u32 [#allocation2], 4
      %s19 = int_to_ptr.vmem [resolvable:$true] %s18
      %24 = dma.hbm_to_vmem [thread:$0]  %s0, 256, %s19, [#allocation3], 128, 128, 8
    $region5: #{tpu_custom_call.1} parent=1 // pred_fallthru
      _
    // Predicated region
    $region6: #{tpu_custom_call.1} parent=1 // pred_check
      _
    $region7: #{tpu_custom_call.1} parent=1 // pred_check_branch
      %26 = sbr.rel (0) target = $region9
    $region8: #{tpu_custom_call.1} parent=1 // pred_region
      %s28 = ssub.s32 128, 128
      %29 = vsyncadd [#allocation5], %s28
      %s30 = sshll.u32 [#allocation4], 4
      %s31 = int_to_ptr.vmem [resolvable:$true] %s30
      %36 = dma.hbm_to_vmem [thread:$0]  %s1, 128, %s31, [#allocation5], 64, 64, 4
    $region9: #{tpu_custom_call.1} parent=1 // pred_fallthru
      _
    // Predicated region
    $region10: #{tpu_custom_call.1} parent=1 // pred_check
      _
    $region11: #{tpu_custom_call.1} parent=1 // pred_check_branch
      %38 = sbr.rel (0) target = $region13
    $region12: #{tpu_custom_call.1} parent=1 // pred_region
      %s40 = ssub.s32 1024, 1024
      %41 = vsyncadd [#allocation5], %s40
      %s42 = sshll.u32 [#allocation6], 4
      %s43 = int_to_ptr.vmem [resolvable:$true] %s42
      %48 = dma.hbm_to_vmem [thread:$0]  %s2, 1024, %s43, [#allocation5], 64, 64, 4
    $region13: #{tpu_custom_call.1} parent=1 // pred_fallthru
      _
    // Predicated region
    $region14: #{tpu_custom_call.1} parent=1 // pred_check
      _
    $region15: #{tpu_custom_call.1} parent=1 // pred_check_branch
      %50 = sbr.rel (0) target = $region17
    $region16: #{tpu_custom_call.1} parent=1 // pred_region
      %s52 = ssub.s32 1024, 1024
      %53 = vsyncadd [#allocation8], %s52
      %s54 = sshll.u32 [#allocation7], 4
      %s55 = int_to_ptr.vmem [resolvable:$true] %s54
      %60 = dma.hbm_to_vmem [thread:$0]  %s3, 1024, %s55, [#allocation8], 64, 64, 4
    $region17: #{tpu_custom_call.1} parent=1 // pred_fallthru
      _
    // Predicated region
    $region18: #{tpu_custom_call.1} parent=1 // pred_check
      _
    $region19: #{tpu_custom_call.1} parent=1 // pred_check_branch
      %62 = sbr.rel (0) target = $region21
    $region20: #{tpu_custom_call.1} parent=1 // pred_region
      _
    $region21: #{tpu_custom_call.1} parent=1 // pred_fallthru
      _
    // Predicated region
    $region22: #{tpu_custom_call.1} parent=1 // pred_check
      _
    $region23: #{tpu_custom_call.1} parent=1 // pred_check_branch
      %64 = sbr.rel (0) target = $region25
    $region24: #{tpu_custom_call.1} parent=1 // pred_region
      %65 = dma.done [#allocation3], 256
    $region25: #{tpu_custom_call.1} parent=1 // pred_fallthru
      _
    // Predicated region
    $region26: #{tpu_custom_call.1} parent=1 // pred_check
      _
    $region27: #{tpu_custom_call.1} parent=1 // pred_check_branch
      %67 = sbr.rel (0) target = $region29
    $region28: #{tpu_custom_call.1} parent=1 // pred_region
      %68 = dma.done [#allocation5], 128
    $region29: #{tpu_custom_call.1} parent=1 // pred_fallthru
      _
    // Predicated region
    $region30: #{tpu_custom_call.1} parent=1 // pred_check
      _
    $region31: #{tpu_custom_call.1} parent=1 // pred_check_branch
      %70 = sbr.rel (0) target = $region33
    $region32: #{tpu_custom_call.1} parent=1 // pred_region
      %71 = dma.done [#allocation5], 1024
    $region33: #{tpu_custom_call.1} parent=1 // pred_fallthru
      _
    // Predicated region
    $region34: #{tpu_custom_call.1} parent=1 // pred_check
      _
    $region35: #{tpu_custom_call.1} parent=1 // pred_check_branch
      %73 = sbr.rel (0) target = $region37
    $region36: #{tpu_custom_call.1} parent=1 // pred_region
      %74 = dma.done [#allocation8], 1024
    $region37: #{tpu_custom_call.1} parent=1 // pred_fallthru
      _
    %v76 = vld [vmem:[#allocation2] sm:$0xff]
    %v77 = vld [vmem:[#allocation2 + $0x8] sm:$0xff]
    %v78 = vpack.c.bf16 %v77, %v76
    %v79 = vld [vmem:[#allocation4] sm:$0xf]
    %v80 = vld [vmem:[#allocation4 + $0x4] sm:$0xf]
    %v81 = vld [vmem:[%s4] sm:$0x1]
    %v82 = vlaneseq
    %v83 = vshrl.u32 %v82, 7
    %v84 = vsub.s32 0, %v83
    %v85 = vrot.slane %v81, %v84
    %v88 = vunpack.c.l.b16 %v79
    %v89 = vunpack.c.l.b16 %v80
    %v90 = vpack.c.b16 %v89, %v88
    %vm92 = vcmask 130048
    %v94 = vsel %vm92, %v78, 0
    %96 = vmatprep.subr.bf16.mxu0 0
    %97 = vmatpush1.bf16.msra.mxu0 0
    %98 = vmatprep.subr.bf16.mxu0 0
    %99 = vmatpush1.bf16.msra.mxu0 0
    %100 = vmatprep.subr.bf16.mxu0 0
    %101 = vmatpush1.bf16.msra.mxu0 0
    %102 = vmatprep.subr.bf16.mxu0 0
    %103 = vmatpush1.bf16.msra.mxu0 0
    %104 = vmatprep.subr.bf16.mxu0 0
    %105 = vmatpush1.bf16.msra.mxu0 0
    %106 = vmatprep.subr.bf16.mxu0 0
    %107 = vmatpush1.bf16.msra.mxu0 0
    %108 = vmatprep.subr.bf16.mxu0 0
    %109 = vmatpush1.bf16.msra.mxu0 0
    %110 = vmatprep.subr.bf16.mxu0 0
    %111 = vmatpush1.bf16.msra.mxu0 %v90
    %112 = vmatprep.subr.bf16.mxu0 0
    %113 = vmatpush2.bf16.msra.mxu0 0
    %114 = vmatprep.subr.bf16.mxu0 0
    %115 = vmatpush2.bf16.msra.mxu0 0
    %116 = vmatprep.subr.bf16.mxu0 0
    %117 = vmatpush2.bf16.msra.mxu0 0
    %118 = vmatprep.subr.bf16.mxu0 0
    %119 = vmatpush2.bf16.msra.mxu0 0
    %120 = vmatprep.subr.bf16.mxu0 0
    %121 = vmatpush2.bf16.msra.mxu0 0
    %122 = vmatprep.subr.bf16.mxu0 0
    %123 = vmatpush2.bf16.msra.mxu0 0
    %124 = vmatprep.subr.bf16.mxu0 0
    %125 = vmatpush2.bf16.msra.mxu0 0
    %126 = vmatprep.subr.bf16.mxu0 0
    %127 = vmatpush2.bf16.msra.mxu0 0
    %128 = vmatprep.mubr.bf16.mxu0 0
    %129 = vmatmul.mubr.bf16.gmra.mxu0 %v94
    %v130 = vpop.f32.mrf.mxu0
    %v131 = vadd.f32 %v85, %v130
    %v132 = vpop.f32.mrf.mxu0
    %v133 = vpop.f32.mrf.mxu0
    %v134 = vadd.f32 %v85, %v133
    %v135 = vpop.f32.mrf.mxu0
    %136 = vdwg.mxu0
    %v137 = vmax.f32 %v131, 0.0
    %v138 = vmax.f32 %v134, 0.0
    %v139 = vpack.c.bf16 %v138, %v137
    %v140 = vld [vmem:[#allocation6] sm:$0xf]
    %v141 = vld [vmem:[#allocation6 + $0x4] sm:$0xf]
    %v142 = vld [vmem:[#allocation6 + $0x8] sm:$0xf]
    %v143 = vld [vmem:[#allocation6 + $0xc] sm:$0xf]
    %v144 = vld [vmem:[#allocation6 + $0x10] sm:$0xf]
    %v145 = vld [vmem:[#allocation6 + $0x14] sm:$0xf]
    %v146 = vld [vmem:[#allocation6 + $0x18] sm:$0xf]
    %v147 = vld [vmem:[#allocation6 + $0x1c] sm:$0xf]
    %v148 = vld [vmem:[#allocation6 + $0x20] sm:$0xf]
    %v149 = vld [vmem:[#allocation6 + $0x24] sm:$0xf]
    %v150 = vld [vmem:[#allocation6 + $0x28] sm:$0xf]
    %v151 = vld [vmem:[#allocation6 + $0x2c] sm:$0xf]
    %v152 = vld [vmem:[#allocation6 + $0x30] sm:$0xf]
    %v153 = vld [vmem:[#allocation6 + $0x34] sm:$0xf]
    %v154 = vld [vmem:[#allocation6 + $0x38] sm:$0xf]
    %v155 = vld [vmem:[#allocation6 + $0x3c] sm:$0xf]
    %v156 = vld [vmem:[%s4 + $0x1] sm:$0x1]
    %v157 = vlaneseq
    %v158 = vshrl.u32 %v157, 7
    %v159 = vsub.s32 0, %v158
    %v160 = vrot.slane %v156, %v159
    %v177 = vunpack.c.l.b16 %v140
    %v178 = vunpack.c.l.b16 %v141
    %v179 = vunpack.c.l.b16 %v142
    %v180 = vunpack.c.l.b16 %v143
    %v181 = vunpack.c.l.b16 %v144
    %v182 = vunpack.c.l.b16 %v145
    %v183 = vunpack.c.l.b16 %v146
    %v184 = vunpack.c.l.b16 %v147
    %v185 = vunpack.c.l.b16 %v148
    %v186 = vunpack.c.l.b16 %v149
    %v187 = vunpack.c.l.b16 %v150
    %v188 = vunpack.c.l.b16 %v151
    %v189 = vunpack.c.l.b16 %v152
    %v190 = vunpack.c.l.b16 %v153
    %v191 = vunpack.c.l.b16 %v154
    %v192 = vunpack.c.l.b16 %v155
    %v193 = vpack.c.b16 %v178, %v177
    %v194 = vpack.c.b16 %v180, %v179
    %v195 = vpack.c.b16 %v182, %v181
    %v196 = vpack.c.b16 %v184, %v183
    %v197 = vpack.c.b16 %v186, %v185
    %v198 = vpack.c.b16 %v188, %v187
    %v199 = vpack.c.b16 %v190, %v189
    %v200 = vpack.c.b16 %v192, %v191
    %209 = vmatprep.subr.bf16.mxu0 0
    %210 = vmatpush1.bf16.msra.mxu0 %v200
    %211 = vmatprep.subr.bf16.mxu0 0
    %212 = vmatpush1.bf16.msra.mxu0 %v199
    %213 = vmatprep.subr.bf16.mxu0 0
    %214 = vmatpush1.bf16.msra.mxu0 %v198
    %215 = vmatprep.subr.bf16.mxu0 0
    %216 = vmatpush1.bf16.msra.mxu0 %v197
    %217 = vmatprep.subr.bf16.mxu0 0
    %218 = vmatpush1.bf16.msra.mxu0 %v196
    %219 = vmatprep.subr.bf16.mxu0 0
    %220 = vmatpush1.bf16.msra.mxu0 %v195
    %221 = vmatprep.subr.bf16.mxu0 0
    %222 = vmatpush1.bf16.msra.mxu0 %v194
    %223 = vmatprep.subr.bf16.mxu0 0
    %224 = vmatpush1.bf16.msra.mxu0 %v193
    %225 = vmatprep.subr.bf16.mxu0 0
    %226 = vmatpush2.bf16.msra.mxu0 0
    %227 = vmatprep.subr.bf16.mxu0 0
    %228 = vmatpush2.bf16.msra.mxu0 0
    %229 = vmatprep.subr.bf16.mxu0 0
    %230 = vmatpush2.bf16.msra.mxu0 0
    %231 = vmatprep.subr.bf16.mxu0 0
    %232 = vmatpush2.bf16.msra.mxu0 0
    %233 = vmatprep.subr.bf16.mxu0 0
    %234 = vmatpush2.bf16.msra.mxu0 0
    %235 = vmatprep.subr.bf16.mxu0 0
    %236 = vmatpush2.bf16.msra.mxu0 0
    %237 = vmatprep.subr.bf16.mxu0 0
    %238 = vmatpush2.bf16.msra.mxu0 0
    %239 = vmatprep.subr.bf16.mxu0 0
    %240 = vmatpush2.bf16.msra.mxu0 0
    %241 = vmatprep.mubr.bf16.mxu0 0
    %242 = vmatmul.mubr.bf16.gmra.mxu0 %v139
    %v243 = vpop.f32.mrf.mxu0
    %v244 = vadd.f32 %v160, %v243
    %v245 = vpop.f32.mrf.mxu0
    %v246 = vpop.f32.mrf.mxu0
    %v247 = vadd.f32 %v160, %v246
    %v248 = vpop.f32.mrf.mxu0
    %249 = vdwg.mxu0
    %v250 = vmax.f32 %v244, 0.0
    %v251 = vmax.f32 %v247, 0.0
    %v252 = vpack.c.bf16 %v251, %v250
    %v253 = vld [vmem:[#allocation7] sm:$0xf]
    %v254 = vld [vmem:[#allocation7 + $0x4] sm:$0xf]
    %v255 = vld [vmem:[#allocation7 + $0x8] sm:$0xf]
    %v256 = vld [vmem:[#allocation7 + $0xc] sm:$0xf]
    %v257 = vld [vmem:[#allocation7 + $0x10] sm:$0xf]
    %v258 = vld [vmem:[#allocation7 + $0x14] sm:$0xf]
    %v259 = vld [vmem:[#allocation7 + $0x18] sm:$0xf]
    %v260 = vld [vmem:[#allocation7 + $0x1c] sm:$0xf]
    %v261 = vld [vmem:[#allocation7 + $0x20] sm:$0xf]
    %v262 = vld [vmem:[#allocation7 + $0x24] sm:$0xf]
    %v263 = vld [vmem:[#allocation7 + $0x28] sm:$0xf]
    %v264 = vld [vmem:[#allocation7 + $0x2c] sm:$0xf]
    %v265 = vld [vmem:[#allocation7 + $0x30] sm:$0xf]
    %v266 = vld [vmem:[#allocation7 + $0x34] sm:$0xf]
    %v267 = vld [vmem:[#allocation7 + $0x38] sm:$0xf]
    %v268 = vld [vmem:[#allocation7 + $0x3c] sm:$0xf]
    %v269 = vld [vmem:[%s4 + $0x2] sm:$0x1]
    %v270 = vlaneseq
    %v271 = vshrl.u32 %v270, 7
    %v272 = vsub.s32 0, %v271
    %v273 = vrot.slane %v269, %v272
    %v290 = vunpack.c.l.b16 %v253
    %v291 = vunpack.c.l.b16 %v254
    %v292 = vunpack.c.l.b16 %v255
    %v293 = vunpack.c.l.b16 %v256
    %v294 = vunpack.c.l.b16 %v257
    %v295 = vunpack.c.l.b16 %v258
    %v296 = vunpack.c.l.b16 %v259
    %v297 = vunpack.c.l.b16 %v260
    %v298 = vunpack.c.l.b16 %v261
    %v299 = vunpack.c.l.b16 %v262
    %v300 = vunpack.c.l.b16 %v263
    %v301 = vunpack.c.l.b16 %v264
    %v302 = vunpack.c.l.b16 %v265
    %v303 = vunpack.c.l.b16 %v266
    %v304 = vunpack.c.l.b16 %v267
    %v305 = vunpack.c.l.b16 %v268
    %v306 = vpack.c.b16 %v291, %v290
    %v307 = vpack.c.b16 %v293, %v292
    %v308 = vpack.c.b16 %v295, %v294
    %v309 = vpack.c.b16 %v297, %v296
    %v310 = vpack.c.b16 %v299, %v298
    %v311 = vpack.c.b16 %v301, %v300
    %v312 = vpack.c.b16 %v303, %v302
    %v313 = vpack.c.b16 %v305, %v304
    %322 = vmatprep.subr.bf16.mxu0 0
    %323 = vmatpush1.bf16.msra.mxu0 %v313
    %324 = vmatprep.subr.bf16.mxu0 0
    %325 = vmatpush1.bf16.msra.mxu0 %v312
    %326 = vmatprep.subr.bf16.mxu0 0
    %327 = vmatpush1.bf16.msra.mxu0 %v311
    %328 = vmatprep.subr.bf16.mxu0 0
    %329 = vmatpush1.bf16.msra.mxu0 %v310
    %330 = vmatprep.subr.bf16.mxu0 0
    %331 = vmatpush1.bf16.msra.mxu0 %v309
    %332 = vmatprep.subr.bf16.mxu0 0
    %333 = vmatpush1.bf16.msra.mxu0 %v308
    %334 = vmatprep.subr.bf16.mxu0 0
    %335 = vmatpush1.bf16.msra.mxu0 %v307
    %336 = vmatprep.subr.bf16.mxu0 0
    %337 = vmatpush1.bf16.msra.mxu0 %v306
    %338 = vmatprep.subr.bf16.mxu0 0
    %339 = vmatpush2.bf16.msra.mxu0 0
    %340 = vmatprep.subr.bf16.mxu0 0
    %341 = vmatpush2.bf16.msra.mxu0 0
    %342 = vmatprep.subr.bf16.mxu0 0
    %343 = vmatpush2.bf16.msra.mxu0 0
    %344 = vmatprep.subr.bf16.mxu0 0
    %345 = vmatpush2.bf16.msra.mxu0 0
    %346 = vmatprep.subr.bf16.mxu0 0
    %347 = vmatpush2.bf16.msra.mxu0 0
    %348 = vmatprep.subr.bf16.mxu0 0
    %349 = vmatpush2.bf16.msra.mxu0 0
    %350 = vmatprep.subr.bf16.mxu0 0
    %351 = vmatpush2.bf16.msra.mxu0 0
    %352 = vmatprep.subr.bf16.mxu0 0
    %353 = vmatpush2.bf16.msra.mxu0 0
    %354 = vmatprep.mubr.bf16.mxu0 0
    %355 = vmatmul.mubr.bf16.gmra.mxu0 %v252
    %v356 = vpop.f32.mrf.mxu0
    %v357 = vadd.f32 %v273, %v356
    %v358 = vpop.f32.mrf.mxu0
    %v359 = vpop.f32.mrf.mxu0
    %v360 = vadd.f32 %v273, %v359
    %v361 = vpop.f32.mrf.mxu0
    %362 = vdwg.mxu0
    %v363 = vsub.f32 0.0, %v357
    %v364 = vsub.f32 0.0, %v360
    %v365 = vmul.f32 %v363, 1.442695
    %v366 = vpow.pop %v365
    %v367 = vmul.f32 %v364, 1.442695
    %v368 = vpow.pop %v367
    %v369 = vadd.f32 %v366, 1.0
    %v370 = vadd.f32 %v368, 1.0
    %v371 = vrcp.pop %v369
    %v372 = vrcp.pop %v370
    %vm373 = vcmask 31744
    %374 = vst.msk [vmem:[%s5] sm:$0xff] %vm373, %v371
    %375 = vst.msk [vmem:[%s5 + $0x8] sm:$0xff] %vm373, %v372
    // Predicated region
    $region38: #{tpu_custom_call.1} parent=1 // pred_check
      _
    $region39: #{tpu_custom_call.1} parent=1 // pred_check_branch
      %377 = sbr.rel (0) target = $region41
    $region40: #{tpu_custom_call.1} parent=1 // pred_region
      _
    $region41: #{tpu_custom_call.1} parent=1 // pred_fallthru
      _
    // Predicated region
    $region42: #{tpu_custom_call.1} parent=1 // pred_check
      _
    $region43: #{tpu_custom_call.1} parent=1 // pred_check_branch
      %379 = sbr.rel (0) target = $region45
    $region44: #{tpu_custom_call.1} parent=1 // pred_region
      _
    $region45: #{tpu_custom_call.1} parent=1 // pred_fallthru
      _
    %380 = vsyncpa [#allocation3], 1
    %381 = vsyncpa [#allocation5], 1
    %382 = vsyncpa [#allocation8], 1

</llo_original>
